<compile_context>
chip_gen: v7x
topology: tpu7x:2x2x1
jax: 0.10.0
libtpu: 0.0.40
codegen_flags: <defaults>
</compile_context>

<pallas_src>
import math

import numpy as np

import jax
import jax.numpy as jnp
from jax.experimental import pallas as pl
from jax.experimental.pallas import tpu as pltpu


def _round_up(x: int, m: int) -> int:
    return ((x + m - 1) // m) * m


def _make_kernel(k: int):
    def kernel(time_ref, const_ref, out_ref):
        # time_ref : (k, TB, 1)  f32  -- time_ref[g, r, 0] = timestep of row r*k+g
        # const_ref: (k+1, LW)   f32  -- rows 0..k-1: group-masked [freqs, freqs],
        #                                row k: phase [0.., pi/2..] tiled k times
        # out_ref  : (TB, LW)         -- LW = k*dim (multiple of 128 when packed)
        acc = const_ref[k:k + 1, :]                        # (1, LW) phase row
        for g in range(k):                                 # unrolled, k <= 16
            # (TB,1) * (1,LW) broadcast multiply-add; masked freq rows are
            # exactly 0.0 outside group g, so cross-group terms add exact zeros.
            acc = acc + time_ref[g] * const_ref[g:g + 1, :]
        # cos(x) = sin(x + pi/2): one full-width sin, one dense store.
        out_ref[...] = jnp.sin(acc).astype(out_ref.dtype)
    return kernel


def sinusoidal_position_embeddings(time: jax.Array, dim: int, *,
                                   block_b: int = 512,
                                   out_dtype=jnp.float32) -> jax.Array:
    """time: (B,) float array -> (B, dim) embeddings (default float32)."""
    assert dim % 2 == 0 and dim >= 4, "dim must be even and >= 4"
    b = time.shape[0]
    half_dim = dim // 2

    # ---- lane packing factor: k batch rows per 128-aligned output row ------
    k = (dim * 128 // math.gcd(dim, 128)) // dim          # lcm(dim,128) / dim
    if k > 16:   # awkward dim: fall back to k=1 (masked stores, still correct)
        k = 1
    lane_w = k * dim

    # ---- static trig tables at trace time (no in-kernel iota/exp) ----------
    scale = math.log(10000.0) / (half_dim - 1)
    freqs = np.exp(np.arange(half_dim, dtype=np.float64) * -scale)
    freqs_full = np.concatenate([freqs, freqs]).astype(np.float32)        # (dim,)
    phase_full = np.concatenate(
        [np.zeros(half_dim), np.full(half_dim, np.pi / 2.0)]
    ).astype(np.float32)                                                  # (dim,)
    const = np.zeros((k + 1, lane_w), np.float32)
    for g in range(k):
        const[g, g * dim:(g + 1) * dim] = freqs_full      # per-group masked freqs
    const[k, :] = np.tile(phase_full, k)                  # phase row
    const_j = jnp.asarray(const)

    # ---- batch layout: (k, n_rows, 1); tiny pad only if k does not divide B
    b_pad = _round_up(b, k)
    n_rows = b_pad // k
    time_f32 = time.astype(jnp.float32)
    if b_pad != b:
        time_f32 = jnp.pad(time_f32, (0, b_pad - b))
    if k > 1:
        time_kr = time_f32.reshape(n_rows, k).T.reshape(k, n_rows, 1)
    else:
        time_kr = time_f32.reshape(1, n_rows, 1)

    # ---- tile size: VMEM-aware, and >=2 grid steps when there is enough work
    # Double-buffered VMEM per batch row: out (lane_w) + lane-padded time (k*128).
    bytes_per_row = 2 * 4 * (lane_w + k * 128)
    vmem_rows = max(8, ((8 * 2 ** 20) // bytes_per_row) // 8 * 8)   # ~8 MiB budget
    split_rows = max(8, _round_up(pl.cdiv(n_rows, 2), 8))           # v7x megacore
    cap = min(block_b, vmem_rows, split_rows)
    tb = n_rows if n_rows <= cap else max(8, (cap // 8) * 8)
    num_blocks = pl.cdiv(n_rows, tb)

    out = pl.pallas_call(
        _make_kernel(k),
        out_shape=jax.ShapeDtypeStruct((n_rows, lane_w), out_dtype),
        grid=(num_blocks,),
        in_specs=[
            pl.BlockSpec((k, tb, 1), lambda r: (0, r, 0)),       # time tile
            pl.BlockSpec((k + 1, lane_w), lambda r: (0, 0)),     # resident consts
        ],
        out_specs=pl.BlockSpec((tb, lane_w), lambda r: (r, 0)),
        compiler_params=pltpu.CompilerParams(
            dimension_semantics=("parallel",),    # megacore-shardable batch axis
        ),
    )(time_kr, const_j)

    # (n_rows, k*dim) row-major is bit-identical to (b_pad, dim): free reshape.
    emb = out.reshape(b_pad, dim)
    return emb if b_pad == b else emb[:b]


def _reference(time: jax.Array, dim: int) -> jax.Array:
    half_dim = dim // 2
    scale = math.log(10000.0) / (half_dim - 1)
    freqs = jnp.exp(jnp.arange(half_dim, dtype=jnp.float32) * -scale)
    args = time.astype(jnp.float32)[:, None] * freqs[None, :]
    return jnp.concatenate([jnp.sin(args), jnp.cos(args)], axis=-1)


if __name__ == "__main__":
    key = jax.random.PRNGKey(0)
    B, DIM = 8, 32
    # timesteps like the diffusion model would pass in (positive floats)
    time = jax.random.uniform(key, (B,), dtype=jnp.float32) * 1000.0

    out = sinusoidal_position_embeddings(time, DIM)
    out = jax.block_until_ready(out)

    ref = _reference(time, DIM)
    assert out.shape == (B, DIM) and out.dtype == jnp.float32
    # cos(x) = sin(x + pi/2) is exact math; for f32 arguments up to ~1e3 the
    # extra rounding of (x + pi/2) contributes a few e-5 absolute error.
    assert jnp.allclose(out, ref, atol=1e-4, rtol=1e-4)

    print("KERNEL_OK")
</pallas_src>

<mosaic_0001>
module attributes {stable_mosaic.version = 11 : i64} {
  func.func @kernel(%arg0: i32, %arg1: memref<4x2x1xf32, #tpu.memory_space<vmem>>, %arg2: memref<5x128xf32, #tpu.memory_space<vmem>>, %arg3: memref<2x128xf32, #tpu.memory_space<vmem>>) attributes {dimension_semantics = [#tpu.dimension_semantics<parallel>], iteration_bounds = array<i64: 1>, scalar_prefetch = 0 : i64, scratch_operands = 0 : i64, tpu.core_type = #tpu.core_type<tc>, window_params = [{transform_indices = @transform_0, window_bounds = array<i64: 4, 2, 1>}, {pipeline_mode = #tpu.pipeline_mode<synchronous>, transform_indices = @transform_1, window_bounds = array<i64: 5, 128>}, {transform_indices = @transform_2, window_bounds = array<i64: 2, 128>}]} {
    %c4 = arith.constant 4 : index
    %c0 = arith.constant 0 : index
    %0 = vector.load %arg2[%c4, %c0] : memref<5x128xf32, #tpu.memory_space<vmem>>, vector<1x128xf32>
    %c0_0 = arith.constant 0 : index
    %c0_1 = arith.constant 0 : index
    %c0_2 = arith.constant 0 : index
    %1 = vector.load %arg1[%c0_0, %c0_1, %c0_2] : memref<4x2x1xf32, #tpu.memory_space<vmem>>, vector<1x2x1xf32>
    %2 = vector.shape_cast %1 : vector<1x2x1xf32> to vector<2x1xf32>
    %c0_3 = arith.constant 0 : index
    %c0_4 = arith.constant 0 : index
    %3 = vector.load %arg2[%c0_3, %c0_4] : memref<5x128xf32, #tpu.memory_space<vmem>>, vector<1x128xf32>
    %4 = vector.broadcast %2 : vector<2x1xf32> to vector<2x128xf32>
    %5 = vector.broadcast %3 : vector<1x128xf32> to vector<2x128xf32>
    %6 = arith.mulf %4, %5 : vector<2x128xf32>
    %7 = vector.broadcast %0 : vector<1x128xf32> to vector<2x128xf32>
    %8 = arith.addf %7, %6 : vector<2x128xf32>
    %c1 = arith.constant 1 : index
    %c0_5 = arith.constant 0 : index
    %c0_6 = arith.constant 0 : index
    %9 = vector.load %arg1[%c1, %c0_5, %c0_6] : memref<4x2x1xf32, #tpu.memory_space<vmem>>, vector<1x2x1xf32>
    %10 = vector.shape_cast %9 : vector<1x2x1xf32> to vector<2x1xf32>
    %c1_7 = arith.constant 1 : index
    %c0_8 = arith.constant 0 : index
    %11 = vector.load %arg2[%c1_7, %c0_8] : memref<5x128xf32, #tpu.memory_space<vmem>>, vector<1x128xf32>
    %12 = vector.broadcast %10 : vector<2x1xf32> to vector<2x128xf32>
    %13 = vector.broadcast %11 : vector<1x128xf32> to vector<2x128xf32>
    %14 = arith.mulf %12, %13 : vector<2x128xf32>
    %15 = arith.addf %8, %14 : vector<2x128xf32>
    %c2 = arith.constant 2 : index
    %c0_9 = arith.constant 0 : index
    %c0_10 = arith.constant 0 : index
    %16 = vector.load %arg1[%c2, %c0_9, %c0_10] : memref<4x2x1xf32, #tpu.memory_space<vmem>>, vector<1x2x1xf32>
    %17 = vector.shape_cast %16 : vector<1x2x1xf32> to vector<2x1xf32>
    %c2_11 = arith.constant 2 : index
    %c0_12 = arith.constant 0 : index
    %18 = vector.load %arg2[%c2_11, %c0_12] : memref<5x128xf32, #tpu.memory_space<vmem>>, vector<1x128xf32>
    %19 = vector.broadcast %17 : vector<2x1xf32> to vector<2x128xf32>
    %20 = vector.broadcast %18 : vector<1x128xf32> to vector<2x128xf32>
    %21 = arith.mulf %19, %20 : vector<2x128xf32>
    %22 = arith.addf %15, %21 : vector<2x128xf32>
    %c3 = arith.constant 3 : index
    %c0_13 = arith.constant 0 : index
    %c0_14 = arith.constant 0 : index
    %23 = vector.load %arg1[%c3, %c0_13, %c0_14] : memref<4x2x1xf32, #tpu.memory_space<vmem>>, vector<1x2x1xf32>
    %24 = vector.shape_cast %23 : vector<1x2x1xf32> to vector<2x1xf32>
    %c3_15 = arith.constant 3 : index
    %c0_16 = arith.constant 0 : index
    %25 = vector.load %arg2[%c3_15, %c0_16] : memref<5x128xf32, #tpu.memory_space<vmem>>, vector<1x128xf32>
    %26 = vector.broadcast %24 : vector<2x1xf32> to vector<2x128xf32>
    %27 = vector.broadcast %25 : vector<1x128xf32> to vector<2x128xf32>
    %28 = arith.mulf %26, %27 : vector<2x128xf32>
    %29 = arith.addf %22, %28 : vector<2x128xf32>
    %30 = math.sin %29 : vector<2x128xf32>
    %c0_17 = arith.constant 0 : index
    %c0_18 = arith.constant 0 : index
    %31 = vector.load %arg3[%c0_17, %c0_18] : memref<2x128xf32, #tpu.memory_space<vmem>>, vector<2x128xf32>
    tpu.vector_store %arg3[%c0_17, %c0_18], %30 {strides = array<i32>} : memref<2x128xf32, #tpu.memory_space<vmem>>, vector<2x128xf32>,
    return
  }
  func.func @transform_0(%arg0: i32) -> (i32, i32, i32) {
    %c0_i32 = arith.constant 0 : i32
    %c0_i32_0 = arith.constant 0 : i32
    %c0_i32_1 = arith.constant 0 : i32
    return %c0_i32, %arg0, %c0_i32_0 : i32, i32, i32
  }
  func.func @transform_1(%arg0: i32) -> (i32, i32) {
    %c0_i32 = arith.constant 0 : i32
    %c0_i32_0 = arith.constant 0 : i32
    %c0_i32_1 = arith.constant 0 : i32
    return %c0_i32, %c0_i32_0 : i32, i32
  }
  func.func @transform_2(%arg0: i32) -> (i32, i32) {
    %c0_i32 = arith.constant 0 : i32
    %c0_i32_0 = arith.constant 0 : i32
    return %arg0, %c0_i32 : i32, i32
  }
}

</mosaic_0001>

<llo_original>
// kernel: tpu_custom_call.1
$region0: #{tpu_custom_call.1}
  #allocation0 [shape = 'u32[]', space=smem, size = 0x4, offset = 0x4, fixed_abs, tag = 'smem constant byte address 0x4 - core index']
  #allocation1 [shape = 'u32[144,128]{1,0:T(1,128)}', space=vmem, size = 0x12000, scoped, tag = 'internal scratch']
  %s0 = inlined_call_operand.vmem [shape: f32[4,2,1], index: 0, kind: input, shape index: {}]
  %s1 = inlined_call_operand.vmem [shape: f32[5,128], index: 1, kind: input, shape index: {}]
  %s2 = inlined_call_operand.hbm [shape: f32[2,128], index: 2, kind: output, shape index: {}]
  %s3 = sld [smem:[#allocation0]]
  $region18: #{tpu_custom_call.1} parent=0
    _
  %s5 = ssub.s32 1, %s3
  %s6 = scalar_select 0, %s5, %s3
  $region1: #{tpu_custom_call.1} parent=0
    #allocation2 [shape = 'u8[1024]{0}', space=vmem, size = 0x400, scoped, tag = 'output window, operand 0, single buffered']
    #allocation3 [shape = 's32[1]{0}', space=sflag, size = 0x4, scoped, tag = 'scoped memory for tpu_custom_call.1']
    %7 = vsyncpa [#allocation3], 0
    // Predicated region
    $region2: #{tpu_custom_call.1} parent=1 // pred_check
      _
    $region3: #{tpu_custom_call.1} parent=1 // pred_check_branch
      %9 = sbr.rel (0) target = $region5
    $region4: #{tpu_custom_call.1} parent=1 // pred_region
      _
    $region5: #{tpu_custom_call.1} parent=1 // pred_fallthru
      _
    // Predicated region
    $region6: #{tpu_custom_call.1} parent=1 // pred_check
      _
    $region7: #{tpu_custom_call.1} parent=1 // pred_check_branch
      %11 = sbr.rel (0) target = $region9
    $region8: #{tpu_custom_call.1} parent=1 // pred_region
      _
    $region9: #{tpu_custom_call.1} parent=1 // pred_fallthru
      _
    %v12 = vld [vmem:[%s1 + $0x4] sm:$0x1]
    %v13 = vld [vmem:[%s0] sm:$0x3]
    %v14 = vld [vmem:[%s1] sm:$0x1]
    %16 = vset.pattern.permute.xlu0 0
    %17 = vperm.xlu0 %16, %v13
    %v18 = vpop.permute.xlu0 %17
    %v20 = vlaneseq
    %v21 = vshrl.u32 %v20, 7
    %v22 = vsub.s32 0, %v21
    %v23 = vrot.slane %v14, %v22
    %v24 = vmul.f32 %v18, %v23
    %v25 = vlaneseq
    %v26 = vshrl.u32 %v25, 7
    %v27 = vsub.s32 0, %v26
    %v28 = vrot.slane %v12, %v27
    %v29 = vadd.f32 %v28, %v24
    %s30 = scalar_lea.vmem %s0, 2
    %v31 = vld [vmem:[%s30] sm:$0x3]
    %v32 = vld [vmem:[%s1 + $0x1] sm:$0x1]
    %34 = vset.pattern.permute.xlu0 0
    %35 = vperm.xlu0 %34, %v31
    %v36 = vpop.permute.xlu0 %35
    %v38 = vlaneseq
    %v39 = vshrl.u32 %v38, 7
    %v40 = vsub.s32 0, %v39
    %v41 = vrot.slane %v32, %v40
    %v42 = vmul.f32 %v36, %v41
    %v43 = vadd.f32 %v29, %v42
    %s44 = scalar_lea.vmem %s0, 4
    %v45 = vld [vmem:[%s44] sm:$0x3]
    %v46 = vld [vmem:[%s1 + $0x2] sm:$0x1]
    %48 = vset.pattern.permute.xlu0 0
    %49 = vperm.xlu0 %48, %v45
    %v50 = vpop.permute.xlu0 %49
    %v52 = vlaneseq
    %v53 = vshrl.u32 %v52, 7
    %v54 = vsub.s32 0, %v53
    %v55 = vrot.slane %v46, %v54
    %v56 = vmul.f32 %v50, %v55
    %v57 = vadd.f32 %v43, %v56
    %s58 = scalar_lea.vmem %s0, 6
    %v59 = vld [vmem:[%s58] sm:$0x3]
    %v60 = vld [vmem:[%s1 + $0x3] sm:$0x1]
    %62 = vset.pattern.permute.xlu0 0
    %63 = vperm.xlu0 %62, %v59
    %v64 = vpop.permute.xlu0 %63
    %v66 = vlaneseq
    %v67 = vshrl.u32 %v66, 7
    %v68 = vsub.s32 0, %v67
    %v69 = vrot.slane %v60, %v68
    %v70 = vmul.f32 %v64, %v69
    %v71 = vadd.f32 %v57, %v70
    %v72 = vand.u32 2147483647, %v71
    %vm73 = vcmp.le.f32.partialorder %v72, 0.7853982
    %vm74 = vcmp.lt.s32.totalorder %v71, 0
    %v75 = vand.u32 %v71, 2139095040
    %v76 = vshrl.u32 %v75, 23
    %v77 = vsub.s32 %v76, 127
    %v78 = vand.u32 2147483647, %v71
    %v79 = vand.u32 %v78, 8388607
    %v80 = vor.u32 %v79, 8388608
    %v81 = vsub.s32 0, %v80
    %v82 = vadd.s32 %v77, 1
    %vm83 = vcmp.gt.s32.totalorder %v82, 0
    %v84 = vsel %vm83, %v82, 0
    %v85 = vshrl.u32 %v84, 5
    %v86 = vand.u32 %v84, 31
    %v87 = vsub.s32 32, %v86
    %v88 = vshrl.u32 683565275, %v87
    %v89 = vshll.u32 683565275, %v86
    %v90 = vshrl.u32 2475754826, %v87
    %v91 = vor.u32 %v89, %v90
    %v92 = vshll.u32 2475754826, %v86
    %v93 = vshrl.u32 2131351028, %v87
    %v94 = vor.u32 %v92, %v93
    %v95 = vshll.u32 2131351028, %v86
    %v96 = vshrl.u32 2102212464, %v87
    %v97 = vor.u32 %v95, %v96
    %v98 = vshll.u32 2102212464, %v86
    %v99 = vshrl.u32 920167782, %v87
    %v100 = vor.u32 %v98, %v99
    %v101 = vshll.u32 920167782, %v86
    %v102 = vshrl.u32 1326507024, %v87
    %v103 = vor.u32 %v101, %v102
    %vm104 = vcmp.lt.s32.totalorder %v85, 1
    %vm105 = vcmp.lt.s32.totalorder %v85, 2
    %vm106 = vcmp.lt.s32.totalorder %v85, 3
    %vm107 = vcmp.lt.s32.totalorder %v85, 4
    %v108 = vsel %vm104, %v88, %v91
    %v109 = vsel %vm107, %v97, 2102212464
    %v110 = vsel %vm106, %v94, %v109
    %v111 = vsel %vm105, %v108, %v110
    %v112 = vsel %vm104, %v91, %v94
    %v113 = vsel %vm107, %v100, 920167782
    %v114 = vsel %vm106, %v97, %v113
    %v115 = vsel %vm105, %v112, %v114
    %v116 = vsel %vm104, %v94, %v97
    %v117 = vsel %vm107, %v103, 1326507024
    %v118 = vsel %vm106, %v100, %v117
    %v119 = vsel %vm105, %v116, %v118
    %v120 = vshll.u32 %v80, 8
    %v121 = vmul.u32.u64.compose %v120, %v119
    %v122 = vextract.low.u32 %v121
    %v123 = vextract.high.u32 %v121
    %v124 = vmul.u32.u64.compose %v120, %v115
    %v125 = vextract.low.u32 %v124
    %v126 = vextract.high.u32 %v124
    %v127 = vmul.u32 %v120, %v111
    %v128 = vadd.s32 %v123, %v125
    %vm129 = vc.u32 %v123, %v125
    %v130 = vadd.s32 %v126, 1
    %v131 = vsel %vm129, %v130, %v126
    %v132 = vadd.s32 %v127, %v131
    %v133 = vadd.s32 %v132, 536870912
    %v134 = vshrl.u32 %v133, 30
    %v135 = vshll.u32 %v134, 30
    %v136 = vsub.s32 %v132, %v135
    %vm137 = vcmp.lt.s32.totalorder %v136, 0
    %v138 = vsub.s32 0, %v136
    %v139 = vsel %vm137, %v138, %v136
    %v140 = vclz %v139
    %v141 = vsub.s32 %v140, 2
    %vm142 = vcmp.gt.s32.totalorder 0, %v141
    %v143 = vsel %vm142, 0, %v141
    %v144 = vsub.s32 32, %v143
    %v145 = vshll.u32 %v136, %v143
    %v146 = vshrl.u32 %v128, %v144
    %v147 = vor.u32 %v145, %v146
    %v148 = vsub.s32 4294967266, %v143
    %v149 = vadd.s32 %v148, 127
    %v150 = vshll.u32 %v149, 23
    %v151 = vor.u32 4788187, %v150
    %v152 = vand.u32 2147483647, %v151
    %v154 = vcvt.s32.f32 %v147
    %v155 = vmul.f32 %v154, %v152
    %v156 = vxor.u32 %v155, 2147483648
    %v157 = vsel %vm74, %v156, %v155
    %v158 = vsub.s32 4, %v134
    %v159 = vsel %vm74, %v158, %v134
    %v160 = vsel %vm73, %v71, %v157
    %v161 = vsel %vm73, 0, %v159
    %v162 = vcosq.f32.pop %v160
    %v163 = vsinq.f32.pop %v160
    %vm164 = vweird.f32 %v71
    %v165 = vadd.s32 %v161, 3
    %v166 = vand.u32 %v165, 3
    %vm167 = vcmp.lt.s32.totalorder %v166, 2
    %vm168 = vcmp.eq.s32.totalorder %v166, 0
    %v169 = vxor.u32 %v163, 2147483648
    %v170 = vsel %vm168, %v162, %v169
    %vm171 = vcmp.eq.s32.totalorder %v166, 2
    %v172 = vxor.u32 %v162, 2147483648
    %v173 = vsel %vm171, %v172, %v163
    %v174 = vsel %vm167, %v170, %v173
    %v175 = vsel %vm164, nan, %v174
    %176 = vst [vmem:[#allocation2] sm:$0x3] %v175
    // Predicated region
    $region10: #{tpu_custom_call.1} parent=1 // pred_check
      _
    $region11: #{tpu_custom_call.1} parent=1 // pred_check_branch
      %178 = sbr.rel (0) target = $region13
    $region12: #{tpu_custom_call.1} parent=1 // pred_region
      %s180 = ssub.s32 32, 32
      %181 = vsyncadd [#allocation3], %s180
      %s183 = sshll.u32 [#allocation2], 4
      %s184 = int_to_ptr.vmem [resolvable:$true] %s183
      %186 = dma.vmem_to_hbm [thread:$0]  %s184, 32, %s2, [#allocation3]
    $region13: #{tpu_custom_call.1} parent=1 // pred_fallthru
      _
    // Predicated region
    $region14: #{tpu_custom_call.1} parent=1 // pred_check
      _
    $region15: #{tpu_custom_call.1} parent=1 // pred_check_branch
      %188 = sbr.rel (0) target = $region17
    $region16: #{tpu_custom_call.1} parent=1 // pred_region
      %189 = dma.done [#allocation3], 32
    $region17: #{tpu_custom_call.1} parent=1 // pred_fallthru
      _
    %190 = vsyncpa [#allocation3], 1

</llo_original>
